<compile_context>
chip_gen: v7x
topology: tpu7x:2x2x1
jax: 0.10.0
libtpu: 0.0.40
codegen_flags: <defaults>
</compile_context>

<pallas_src>
import jax
import jax.numpy as jnp
from jax.experimental import pallas as pl
from jax.experimental.pallas import tpu as pltpu

EPS = 1e-5
LANE = 128
VMEM_LIMIT = 32 * 1024 * 1024          # <= physical VMEM on v5e/v6e/v7x
BN_TILE_M = 256                        # rows per BN grid step (raise at real sizes)

# MXU operand precision: bf16 inputs + f32 accumulation (~2-4x MXU throughput
# vs f32xf32 on v5e/v6e/v7x, half the operand DMA bytes).
MXU_DTYPE = jnp.bfloat16


def _round_up(x, m):
    return (x + m - 1) // m * m


# ----------------------------- Pallas kernels -----------------------------

def _make_bn_stats_kernel(m_true):
    """Tiling-safe BN statistics -> per-channel (scale, shift)."""
    inv_m = 1.0 / float(m_true)

    def kernel(x_ref, g_ref, b_ref, o_ref):
        i = pl.program_id(0)

        @pl.when(i == 0)
        def _init():
            o_ref[...] = jnp.zeros_like(o_ref)

        x = x_ref[...].astype(jnp.float32)
        part = jnp.concatenate(
            [jnp.sum(x, axis=0, keepdims=True),
             jnp.sum(x * x, axis=0, keepdims=True)], axis=0)
        o_ref[...] += part

        @pl.when(i == pl.num_programs(0) - 1)
        def _finalize():
            tot = o_ref[...]
            mean = tot[0:1, :] * inv_m
            var = tot[1:2, :] * inv_m - mean * mean        # biased (train mode)
            inv = jax.lax.rsqrt(var + EPS)
            scale = g_ref[...] * inv
            shift = b_ref[...] - mean * scale
            o_ref[...] = jnp.concatenate([scale, shift], axis=0)

    return kernel


def bn_norm_relu_kernel(x_ref, ss_ref, o_ref):
    # Elementwise math kept in f32 (v5e has no bf16 VPU/EUP).
    x = x_ref[...].astype(jnp.float32)
    scale = ss_ref[0:1, :]
    shift = ss_ref[1:2, :]
    o_ref[...] = jnp.maximum(x * scale + shift, 0.0).astype(o_ref.dtype)


def matmul_kernel(a_ref, b_ref, o_ref, acc_ref):
    # Tiled MXU matmul with K-reduction grid axis and f32 VMEM accumulator.
    @pl.when(pl.program_id(2) == 0)
    def _init():
        acc_ref[...] = jnp.zeros_like(acc_ref)

    acc_ref[...] += jnp.dot(a_ref[...].astype(MXU_DTYPE),
                            b_ref[...].astype(MXU_DTYPE),
                            preferred_element_type=jnp.float32)

    @pl.when(pl.program_id(2) == pl.num_programs(2) - 1)
    def _done():
        o_ref[...] = acc_ref[...].astype(o_ref.dtype)


def _make_conv3x3_kernel(stride, Ho, Ws, R, add_residual):
    """Direct 3x3 conv: 9 tap-matmuls over the VMEM-resident padded activation
    (row-flattened stride-parity planes) + optional fused residual add."""
    s = stride
    offs = []
    for ky in range(3):
        for kx in range(3):
            p = (ky % s) * s + (kx % s)
            offs.append(p * R + (ky // s) * Ws + (kx // s))
    MR = Ho * Ws

    def kernel(p_ref, w_ref, *rest):
        o_ref = rest[-1]
        acc = jnp.zeros((MR, o_ref.shape[-1]), jnp.float32)
        for t, off in enumerate(offs):                  # static unroll, 9 taps
            a = p_ref[0, off:off + MR, :].astype(MXU_DTYPE)
            acc = acc + jnp.dot(a, w_ref[t], preferred_element_type=jnp.float32)
        if add_residual:
            acc = acc + rest[0][0].astype(jnp.float32)
        o_ref[0] = acc.astype(o_ref.dtype)

    return kernel


# --------------------------- pallas_call wrappers --------------------------

def bn_scale_shift(x2d, gamma, beta, tm=BN_TILE_M):
    """Per-channel (scale, shift) = (gamma*rsqrt(var+eps), beta - mean*scale).

    Statistics are accumulated over an 'arbitrary' M-grid axis into a resident
    (2, C) output block, so tile size never changes the result (padded zero
    rows don't affect the sums; we divide by the true M)."""
    M, C = x2d.shape
    Mp = _round_up(M, tm)
    xpad = jnp.pad(x2d, ((0, Mp - M), (0, 0)))
    return pl.pallas_call(
        _make_bn_stats_kernel(M),
        out_shape=jax.ShapeDtypeStruct((2, C), jnp.float32),
        grid_spec=pltpu.PrefetchScalarGridSpec(
            num_scalar_prefetch=0,
            grid=(Mp // tm,),
            in_specs=[pl.BlockSpec((tm, C), lambda i: (i, 0)),
                      pl.BlockSpec((1, C), lambda i: (0, 0)),
                      pl.BlockSpec((1, C), lambda i: (0, 0))],
            out_specs=pl.BlockSpec((2, C), lambda i: (0, 0)),
        ),
        compiler_params=pltpu.CompilerParams(
            dimension_semantics=("arbitrary",),
            vmem_limit_bytes=VMEM_LIMIT,
        ),
    )(xpad,
      gamma.reshape(1, C).astype(jnp.float32),
      beta.reshape(1, C).astype(jnp.float32))


def bn_relu_apply(x2d, ss, tm=BN_TILE_M):
    """Tiled normalize + ReLU given precomputed per-channel (scale, shift)."""
    M, C = x2d.shape
    Mp = _round_up(M, tm)
    xpad = jnp.pad(x2d, ((0, Mp - M), (0, 0)))
    y = pl.pallas_call(
        bn_norm_relu_kernel,
        out_shape=jax.ShapeDtypeStruct((Mp, C), jnp.float32),
        grid_spec=pltpu.PrefetchScalarGridSpec(
            num_scalar_prefetch=0,
            grid=(Mp // tm,),
            in_specs=[pl.BlockSpec((tm, C), lambda i: (i, 0)),
                      pl.BlockSpec((2, C), lambda i: (0, 0))],
            out_specs=pl.BlockSpec((tm, C), lambda i: (i, 0)),
        ),
        compiler_params=pltpu.CompilerParams(
            dimension_semantics=("parallel",),
            vmem_limit_bytes=VMEM_LIMIT,
        ),
    )(xpad, ss)
    return y[:M]


def pallas_matmul(a, b, tm=128, tn=128, tk=128):
    """Tiled MXU matmul (used for the 1x1 shortcut conv).

    128-tiles are plenty at the test shapes; raise to 256-512 at real ResNet
    sizes and roughly halve on v7x (64 MiB VMEM)."""
    M, K = a.shape
    _, N = b.shape
    Mp, Kp, Np = _round_up(M, tm), _round_up(K, tk), _round_up(N, tn)
    ap = jnp.pad(a, ((0, Mp - M), (0, Kp - K)))
    bp = jnp.pad(b, ((0, Kp - K), (0, Np - N)))
    out = pl.pallas_call(
        matmul_kernel,
        out_shape=jax.ShapeDtypeStruct((Mp, Np), jnp.float32),
        grid_spec=pltpu.PrefetchScalarGridSpec(
            num_scalar_prefetch=0,
            grid=(Mp // tm, Np // tn, Kp // tk),
            in_specs=[pl.BlockSpec((tm, tk), lambda i, j, k: (i, k)),
                      pl.BlockSpec((tk, tn), lambda i, j, k: (k, j))],
            out_specs=pl.BlockSpec((tm, tn), lambda i, j, k: (i, j)),
            scratch_shapes=[pltpu.VMEM((tm, tn), jnp.float32)],
        ),
        compiler_params=pltpu.CompilerParams(
            dimension_semantics=("parallel", "parallel", "arbitrary"),
            vmem_limit_bytes=VMEM_LIMIT,
        ),
        cost_estimate=pl.CostEstimate(
            flops=2 * Mp * Np * Kp,
            transcendentals=0,
            bytes_accessed=int(Mp * Kp * ap.dtype.itemsize
                               + Kp * Np * bp.dtype.itemsize + Mp * Np * 4)),
    )(ap, bp)
    return out[:M, :N]


def conv3x3_pallas(a_nhwc, w9, stride, residual=None):
    """3x3 conv, padding=1, optional fused residual add (no HBM im2col).

    a_nhwc:   (N, H, W, Cp)  f32 activation, channels lane-padded.
    w9:       (9, Cp, Op)    channel-padded weights in MXU dtype.
    residual: (N, Ho, Wo, Op) f32 or None.
    returns   (N, Ho, Wo, Op) f32.
    """
    N, H, W, Cp = a_nhwc.shape
    Op = w9.shape[-1]
    s = stride
    Ho = (H - 1) // s + 1
    Wo = (W - 1) // s + 1

    # Zero-pad spatially (conv pad=1), plus up to a stride multiple so all
    # stride-parity planes share one shape.
    Hp = _round_up(H + 2, s)
    Wp = _round_up(W + 2, s)
    xp = jnp.pad(a_nhwc, ((0, 0), (1, Hp - H - 1), (1, Wp - W - 1), (0, 0)))
    Hs, Ws = Hp // s, Wp // s

    # Stride-parity planes: total bytes == padded input (no 9x im2col blow-up).
    parity = jnp.stack(
        [xp[:, py::s, px::s, :] for py in range(s) for px in range(s)], axis=1)
    # Row-flatten each plane; pad rows so every tap's (Ho*Ws)-row slice is
    # in-bounds inside the kernel.
    max_off = ((3 - 1) // s) * Ws + ((3 - 1) // s)
    R = _round_up(max(Hs * Ws, max_off + Ho * Ws), 8)
    P = parity.reshape(N, s * s, Hs * Ws, Cp)
    P = jnp.pad(P, ((0, 0), (0, 0), (0, R - Hs * Ws), (0, 0)))
    P = P.reshape(N, s * s * R, Cp)

    ops = [P, w9]
    in_specs = [
        pl.BlockSpec((1, s * s * R, Cp), lambda n: (n, 0, 0)),
        pl.BlockSpec((9, Cp, Op), lambda n: (0, 0, 0)),
    ]
    if residual is not None:
        r_rows = jnp.pad(residual, ((0, 0), (0, 0), (0, Ws - Wo), (0, 0)))
        r_rows = r_rows.reshape(N, Ho * Ws, Op).astype(jnp.float32)
        ops.append(r_rows)
        in_specs.append(pl.BlockSpec((1, Ho * Ws, Op), lambda n: (n, 0, 0)))

    kernel = _make_conv3x3_kernel(s, Ho, Ws, R, residual is not None)
    bytes_accessed = int(P.size * P.dtype.itemsize + w9.size * w9.dtype.itemsize
                         + N * Ho * Ws * Op * 4 * (2 if residual is not None else 1))

    out = pl.pallas_call(
        kernel,
        out_shape=jax.ShapeDtypeStruct((N, Ho * Ws, Op), jnp.float32),
        grid_spec=pltpu.PrefetchScalarGridSpec(
            num_scalar_prefetch=0,
            grid=(N,),
            in_specs=in_specs,
            out_specs=pl.BlockSpec((1, Ho * Ws, Op), lambda n: (n, 0, 0)),
        ),
        compiler_params=pltpu.CompilerParams(
            dimension_semantics=("parallel",),    # shards images over v7x's 2 TCs
            vmem_limit_bytes=VMEM_LIMIT,
        ),
        cost_estimate=pl.CostEstimate(
            flops=2 * N * (Ho * Ws) * 9 * Cp * Op,
            transcendentals=0,
            bytes_accessed=bytes_accessed),
    )(*ops)

    # Drop the (Ws - Wo) junk columns from the row-flattened output layout.
    return out.reshape(N, Ho, Ws, Op)[:, :, :Wo, :]


# ------------------------------- glue (JAX) --------------------------------

def _prep_conv_w(w_oihw, Cp, Op):
    O, I, kh, kw = w_oihw.shape
    w = jnp.transpose(w_oihw, (2, 3, 1, 0)).reshape(kh * kw, I, O)
    w = jnp.pad(w, ((0, 0), (0, Cp - I), (0, Op - O)))
    return w.astype(MXU_DTYPE)


def preact_block_forward(x_nchw, params, stride):
    """Pallas implementation of PreActBlock.forward (NCHW in, NCHW out)."""
    N, C, H, W = x_nchw.shape
    planes = params["w1"].shape[0]
    Cp = _round_up(C, LANE)
    Pp = _round_up(planes, LANE)
    s = stride
    Ho = (H - 1) // s + 1
    Wo = (W - 1) // s + 1

    x = jnp.transpose(x_nchw, (0, 2, 3, 1)).astype(jnp.float32)    # NHWC
    x = jnp.pad(x, ((0, 0), (0, 0), (0, 0), (0, Cp - C)))          # lane-pad chans

    # --- relu(bn1(x)) ---
    g1 = jnp.pad(params["gamma1"], (0, Cp - C))
    b1 = jnp.pad(params["beta1"], (0, Cp - C))
    x2d = x.reshape(N * H * W, Cp)
    ss1 = bn_scale_shift(x2d, g1, b1)
    a1 = bn_relu_apply(x2d, ss1).reshape(N, H, W, Cp)
    # TODO(synk): fold normalize+ReLU into the conv kernels' input prologue to
    # remove one HBM round trip of the activation.

    # --- shortcut ---
    if "w_sc" in params:
        wsc = params["w_sc"][:, :, 0, 0]                              # (planes, C)
        wsc = jnp.pad(wsc, ((0, Pp - planes), (0, Cp - C))).T         # (Cp, Pp)
        a_sc = a1[:, ::s, ::s, :].reshape(N * Ho * Wo, Cp)
        res = pallas_matmul(a_sc, wsc.astype(MXU_DTYPE)).reshape(N, Ho, Wo, Pp)
    else:
        res = x.reshape(N, H, W, Cp)     # identity: Cp == Pp, H == Ho here

    # --- conv1 (3x3, stride) -> relu(bn2(.)) -> conv2 (3x3) + residual ---
    w1 = _prep_conv_w(params["w1"], Cp, Pp)
    w2 = _prep_conv_w(params["w2"], Pp, Pp)
    g2 = jnp.pad(params["gamma2"], (0, Pp - planes))
    b2 = jnp.pad(params["beta2"], (0, Pp - planes))

    c1 = conv3x3_pallas(a1, w1, s)                                    # (N,Ho,Wo,Pp)
    c1_2d = c1.reshape(N * Ho * Wo, Pp)
    ss2 = bn_scale_shift(c1_2d, g2, b2)
    a2 = bn_relu_apply(c1_2d, ss2).reshape(N, Ho, Wo, Pp)

    out = conv3x3_pallas(a2, w2, 1, residual=res)                     # fused add
    out = out[..., :planes]
    return jnp.transpose(out, (0, 3, 1, 2))                           # NCHW


# ------------------------- pure-JAX reference model -------------------------

def _bn_relu_ref(x_nhwc, gamma, beta):
    mean = x_nhwc.mean(axis=(0, 1, 2))
    var = x_nhwc.var(axis=(0, 1, 2))          # biased, matches train-mode BN
    y = (x_nhwc - mean) * jax.lax.rsqrt(var + EPS) * gamma + beta
    return jnp.maximum(y, 0.0)


def _conv_ref(x_nhwc, w_oihw, stride, pad):
    return jax.lax.conv_general_dilated(
        x_nhwc, jnp.transpose(w_oihw, (2, 3, 1, 0)),
        window_strides=(stride, stride), padding=[(pad, pad), (pad, pad)],
        dimension_numbers=("NHWC", "HWIO", "NHWC"))


def preact_block_ref(x_nchw, params, stride):
    x = jnp.transpose(x_nchw, (0, 2, 3, 1))
    out = _bn_relu_ref(x, params["gamma1"], params["beta1"])
    shortcut = _conv_ref(out, params["w_sc"], stride, 0) if "w_sc" in params else x
    out = _conv_ref(out, params["w1"], stride, 1)
    out = _bn_relu_ref(out, params["gamma2"], params["beta2"])
    out = _conv_ref(out, params["w2"], 1, 1) + shortcut
    return jnp.transpose(out, (0, 3, 1, 2))


# --------------------------------- params -----------------------------------

def make_params(key, in_planes, planes, stride):
    k1, k2, k3 = jax.random.split(key, 3)
    params = {
        "gamma1": jnp.ones((in_planes,), jnp.float32),
        "beta1": jnp.zeros((in_planes,), jnp.float32),
        "gamma2": jnp.ones((planes,), jnp.float32),
        "beta2": jnp.zeros((planes,), jnp.float32),
        "w1": 0.1 * jax.random.normal(k1, (planes, in_planes, 3, 3), jnp.float32),
        "w2": 0.1 * jax.random.normal(k2, (planes, planes, 3, 3), jnp.float32),
    }
    if stride != 1 or in_planes != planes:      # expansion == 1
        params["w_sc"] = 0.1 * jax.random.normal(
            k3, (planes, in_planes, 1, 1), jnp.float32)
    return params


# ----------------------------------- main ------------------------------------

if __name__ == "__main__":
    key = jax.random.PRNGKey(0)
    kx, kp1, kp2 = jax.random.split(key, 3)

    # PyTorch-style NCHW input: batch=2, channels=4, spatial=16x16
    x = jax.random.normal(kx, (2, 4, 16, 16), jnp.float32)

    if MXU_DTYPE == jnp.bfloat16:
        atol, rel_tol = 3e-2, 1e-2       # bf16 MXU operands, f32 accumulation
    else:
        atol, rel_tol = 1e-4, 1e-5       # exact f32 path

    def check(out, ref, name):
        assert out.shape == ref.shape, f"{name}: shape {out.shape} vs {ref.shape}"
        max_abs = float(jnp.max(jnp.abs(out - ref)))
        rel = float(jnp.linalg.norm(out - ref) / (jnp.linalg.norm(ref) + 1e-12))
        assert max_abs < atol and rel < rel_tol, \
            f"{name}: max_abs={max_abs:.3e} rel_l2={rel:.3e}"

    # Case 1: stride=2, in_planes != planes -> exercises 1x1 conv shortcut
    params_a = make_params(kp1, in_planes=4, planes=8, stride=2)
    out_a = preact_block_forward(x, params_a, stride=2)
    jax.block_until_ready(out_a)
    check(out_a, preact_block_ref(x, params_a, stride=2), "shortcut case")

    # Case 2: stride=1, in_planes == planes -> identity shortcut
    params_b = make_params(kp2, in_planes=4, planes=4, stride=1)
    out_b = preact_block_forward(x, params_b, stride=1)
    jax.block_until_ready(out_b)
    check(out_b, preact_block_ref(x, params_b, stride=1), "identity case")

    print("KERNEL_OK")
</pallas_src>

<mosaic_0001>
module attributes {stable_mosaic.version = 11 : i64} {
  func.func @kernel(%arg0: i32, %arg1: memref<256x128xf32, #tpu.memory_space<vmem>>, %arg2: memref<1x128xf32, #tpu.memory_space<vmem>>, %arg3: memref<1x128xf32, #tpu.memory_space<vmem>>, %arg4: memref<2x128xf32, #tpu.memory_space<vmem>>) attributes {dimension_semantics = [#tpu.dimension_semantics<arbitrary>], iteration_bounds = array<i64: 2>, scalar_prefetch = 0 : i64, scratch_operands = 0 : i64, tpu.core_type = #tpu.core_type<tc>, window_params = [{transform_indices = @transform_0, window_bounds = array<i64: 256, 128>}, {pipeline_mode = #tpu.pipeline_mode<synchronous>, transform_indices = @transform_1, window_bounds = array<i64: 1, 128>}, {pipeline_mode = #tpu.pipeline_mode<synchronous>, transform_indices = @transform_2, window_bounds = array<i64: 1, 128>}, {pipeline_mode = #tpu.pipeline_mode<synchronous>, transform_indices = @transform_3, window_bounds = array<i64: 2, 128>}]} {
    %c0_i32 = arith.constant 0 : i32
    %0 = arith.cmpi eq, %arg0, %c0_i32 : i32
    %1 = arith.extui %0 : i1 to i32
    %c0_i32_0 = arith.constant 0 : i32
    %2 = arith.cmpi ne, %1, %c0_i32_0 : i32
    scf.if %2 {
      %cst_8 = arith.constant 0.000000e+00 : f32
      %16 = vector.broadcast %cst_8 : f32 to vector<2x128xf32>
      %c0_9 = arith.constant 0 : index
      %c0_10 = arith.constant 0 : index
      %17 = vector.load %arg4[%c0_9, %c0_10] : memref<2x128xf32, #tpu.memory_space<vmem>>, vector<2x128xf32>
      tpu.vector_store %arg4[%c0_9, %c0_10], %16 {strides = array<i32>} : memref<2x128xf32, #tpu.memory_space<vmem>>, vector<2x128xf32>,
    } else {
    }
    %c0 = arith.constant 0 : index
    %c0_1 = arith.constant 0 : index
    %3 = vector.load %arg1[%c0, %c0_1] : memref<256x128xf32, #tpu.memory_space<vmem>>, vector<256x128xf32>
    %cst = arith.constant dense<0.000000e+00> : vector<128xf32>
    %4 = vector.multi_reduction <add>, %3, %cst [0] : vector<256x128xf32> to vector<128xf32>
    %5 = vector.shape_cast %4 : vector<128xf32> to vector<1x128xf32>
    %6 = arith.mulf %3, %3 : vector<256x128xf32>
    %cst_2 = arith.constant dense<0.000000e+00> : vector<128xf32>
    %7 = vector.multi_reduction <add>, %6, %cst_2 [0] : vector<256x128xf32> to vector<128xf32>
    %8 = vector.shape_cast %7 : vector<128xf32> to vector<1x128xf32>
    %9 = tpu.concatenate %5, %8 in 0 : vector<1x128xf32>, vector<1x128xf32> -> vector<2x128xf32>
    %c0_3 = arith.constant 0 : index
    %c0_4 = arith.constant 0 : index
    %10 = vector.load %arg4[%c0_3, %c0_4] : memref<2x128xf32, #tpu.memory_space<vmem>>, vector<2x128xf32>
    %11 = arith.addf %10, %9 : vector<2x128xf32>
    %c0_5 = arith.constant 0 : index
    %c0_6 = arith.constant 0 : index
    %12 = vector.load %arg4[%c0_5, %c0_6] : memref<2x128xf32, #tpu.memory_space<vmem>>, vector<2x128xf32>
    tpu.vector_store %arg4[%c0_5, %c0_6], %11 {strides = array<i32>} : memref<2x128xf32, #tpu.memory_space<vmem>>, vector<2x128xf32>,
    %c1_i32 = arith.constant 1 : i32
    %13 = arith.cmpi eq, %arg0, %c1_i32 : i32
    %14 = arith.extui %13 : i1 to i32
    %c0_i32_7 = arith.constant 0 : i32
    %15 = arith.cmpi ne, %14, %c0_i32_7 : i32
    scf.if %15 {
      %c0_8 = arith.constant 0 : index
      %c0_9 = arith.constant 0 : index
      %16 = vector.load %arg4[%c0_8, %c0_9] : memref<2x128xf32, #tpu.memory_space<vmem>>, vector<2x128xf32>
      %17 = vector.extract_strided_slice %16 {offsets = [0, 0], sizes = [1, 128], strides = [1, 1]} : vector<2x128xf32> to vector<1x128xf32>
      %cst_10 = arith.constant 0.001953125 : f32
      %18 = vector.broadcast %cst_10 : f32 to vector<1x128xf32>
      %19 = arith.mulf %17, %18 : vector<1x128xf32>
      %20 = vector.extract_strided_slice %16 {offsets = [1, 0], sizes = [1, 128], strides = [1, 1]} : vector<2x128xf32> to vector<1x128xf32>
      %cst_11 = arith.constant 0.001953125 : f32
      %21 = vector.broadcast %cst_11 : f32 to vector<1x128xf32>
      %22 = arith.mulf %20, %21 : vector<1x128xf32>
      %23 = arith.mulf %19, %19 : vector<1x128xf32>
      %24 = arith.subf %22, %23 : vector<1x128xf32>
      %cst_12 = arith.constant 9.99999974E-6 : f32
      %25 = vector.broadcast %cst_12 : f32 to vector<1x128xf32>
      %26 = arith.addf %24, %25 : vector<1x128xf32>
      %27 = math.rsqrt %26 : vector<1x128xf32>
      %c0_13 = arith.constant 0 : index
      %c0_14 = arith.constant 0 : index
      %28 = vector.load %arg2[%c0_13, %c0_14] : memref<1x128xf32, #tpu.memory_space<vmem>>, vector<1x128xf32>
      %29 = arith.mulf %28, %27 : vector<1x128xf32>
      %c0_15 = arith.constant 0 : index
      %c0_16 = arith.constant 0 : index
      %30 = vector.load %arg3[%c0_15, %c0_16] : memref<1x128xf32, #tpu.memory_space<vmem>>, vector<1x128xf32>
      %31 = arith.mulf %19, %29 : vector<1x128xf32>
      %32 = arith.subf %30, %31 : vector<1x128xf32>
      %33 = tpu.concatenate %29, %32 in 0 : vector<1x128xf32>, vector<1x128xf32> -> vector<2x128xf32>
      %c0_17 = arith.constant 0 : index
      %c0_18 = arith.constant 0 : index
      %34 = vector.load %arg4[%c0_17, %c0_18] : memref<2x128xf32, #tpu.memory_space<vmem>>, vector<2x128xf32>
      tpu.vector_store %arg4[%c0_17, %c0_18], %33 {strides = array<i32>} : memref<2x128xf32, #tpu.memory_space<vmem>>, vector<2x128xf32>,
    } else {
    }
    return
  }
  func.func @transform_0(%arg0: i32) -> (i32, i32) {
    %c0_i32 = arith.constant 0 : i32
    %c0_i32_0 = arith.constant 0 : i32
    return %arg0, %c0_i32 : i32, i32
  }
  func.func @transform_1(%arg0: i32) -> (i32, i32) {
    %c0_i32 = arith.constant 0 : i32
    %c0_i32_0 = arith.constant 0 : i32
    %c0_i32_1 = arith.constant 0 : i32
    return %c0_i32, %c0_i32_0 : i32, i32
  }
  func.func @transform_2(%arg0: i32) -> (i32, i32) {
    %c0_i32 = arith.constant 0 : i32
    %c0_i32_0 = arith.constant 0 : i32
    %c0_i32_1 = arith.constant 0 : i32
    return %c0_i32, %c0_i32_0 : i32, i32
  }
  func.func @transform_3(%arg0: i32) -> (i32, i32) {
    %c0_i32 = arith.constant 0 : i32
    %c0_i32_0 = arith.constant 0 : i32
    %c0_i32_1 = arith.constant 0 : i32
    return %c0_i32, %c0_i32_0 : i32, i32
  }
}

</mosaic_0001>

<llo_original>
// kernel: tpu_custom_call.1
$region0: #{tpu_custom_call.1}
  #allocation0 [shape = 'u32[]', space=smem, size = 0x4, offset = 0x4, fixed_abs, tag = 'smem constant byte address 0x4 - core index']
  #allocation1 [shape = 'u32[144,128]{1,0:T(1,128)}', space=vmem, size = 0x12000, scoped, tag = 'internal scratch']
  %s0 = inlined_call_operand.hbm [shape: f32[512,128], index: 0, kind: input, shape index: {}]
  %s1 = inlined_call_operand.vmem [shape: f32[1,128], index: 1, kind: input, shape index: {}]
  %s2 = inlined_call_operand.vmem [shape: f32[1,128], index: 2, kind: input, shape index: {}]
  %s3 = inlined_call_operand.hbm [shape: f32[2,128], index: 3, kind: output, shape index: {}]
  %s4 = sld [smem:[#allocation0]]
  $region57: #{tpu_custom_call.1} parent=0
    _
  %s6 = ssub.s32 1, %s4
  %s7 = scalar_select 0, %s6, %s4
  $region1: #{tpu_custom_call.1} parent=0
    #allocation2 [shape = 'u8[262144]{0}', space=vmem, size = 0x40000, scoped, tag = 'input window, operand 0']
    #allocation3 [shape = 's32[2]{0}', space=sflag, size = 0x8, scoped, tag = 'scoped memory for tpu_custom_call.1']
    #allocation4 [shape = 's32[2]{0}', space=sflag, size = 0x8, scoped, tag = 'scoped memory for tpu_custom_call.1']
    #allocation5 [shape = 'u8[1024]{0}', space=vmem, size = 0x400, scoped, tag = 'output window, operand 0, single buffered']
    %8 = vsyncpa [#allocation3], 0
    %s9 = scalar_lea.sflag [#allocation3], 1
    %10 = vsyncpa %s9, 0
    %11 = vsyncpa [#allocation4], 0
    loop: start=0, step=1, limit=4
    $region2: #{tpu_custom_call.1} parent=1 // loop_pre_header
      _
    $region3: #{tpu_custom_call.1} parent=1 // loop_header
      %s13 = sphi 0, %s17
      %p14 = scmp.ge.s32.totalorder %s13, 4
      %s23 = sphi 0, %s25
      %s26 = sphi 0, %s23
      %s27 = sphi 0, %s26
      %s43 = sphi 0, %s27
      %s47 = sphi 0, %s47
      %s49 = sphi 0, %s47
      %s50 = sphi 0, %s49
      %s64 = sphi 0, %s50
      %s68 = sphi 0, %s68
      %s70 = sphi 0, %s68
      %s71 = sphi 0, %s70
      %s85 = sphi 0, %s71
      %s89 = sphi 0, %s89
      %s91 = sphi 0, %s89
      %s92 = sphi 0, %s91
      %s106 = sphi 0, %s92
    $region4: #{tpu_custom_call.1} parent=1 // loop_header_branch
      %16 = sbr.rel (%p14) target = $region8
    $region5: #{tpu_custom_call.1} parent=1 // loop_body
      %s18 = ssub.s32 %s13, 1
      %s19 = ssub.s32 %s13, 2
      %s20 = sadd.s32 %s13, 1
      %s21 = ssub.s32 %s13, %s20
      %p22 = scmp.eq.s32.totalorder %s21, 0
      %s24 = sadd.s32 %s23, 1
      %s25 = scalar_select %p22, %s23, %s24
      %p28 = pneg %p22
      %p29 = scmp.eq.s32.totalorder %s13, 1
      %p30 = por %p28, %p29
      %p31 = scmp.ne.s32.totalorder %s23, %s26
      %p32 = scmp.eq.s32.totalorder %s13, 0
      %p33 = por %p31, %p32
      %p34 = scmp.ne.s32.totalorder %s23, %s26
      %p35 = scmp.eq.s32.totalorder %s18, 1
      %p36 = por %p34, %p35
      %p37 = scmp.ne.s32.totalorder %s26, %s27
      %p38 = scmp.eq.s32.totalorder %s18, 0
      %p39 = por %p37, %p38
      %p40 = scmp.ne.s32.totalorder %s26, %s27
      %p41 = scmp.eq.s32.totalorder %s19, 1
      %p42 = por %p40, %p41
      %p44 = scmp.ne.s32.totalorder %s27, %s43
      %p45 = scmp.eq.s32.totalorder %s19, 0
      %p46 = por %p44, %p45
      %s48 = sadd.s32 %s47, 1
      %p51 = scmp.eq.s32.totalorder %s13, 1
      %p52 = scmp.ne.s32.totalorder %s47, %s49
      %p53 = scmp.eq.s32.totalorder %s13, 0
      %p54 = por %p52, %p53
      %p55 = scmp.ne.s32.totalorder %s47, %s49
      %p56 = scmp.eq.s32.totalorder %s18, 1
      %p57 = por %p55, %p56
      %p58 = scmp.ne.s32.totalorder %s49, %s50
      %p59 = scmp.eq.s32.totalorder %s18, 0
      %p60 = por %p58, %p59
      %p61 = scmp.ne.s32.totalorder %s49, %s50
      %p62 = scmp.eq.s32.totalorder %s19, 1
      %p63 = por %p61, %p62
      %p65 = scmp.ne.s32.totalorder %s50, %s64
      %p66 = scmp.eq.s32.totalorder %s19, 0
      %p67 = por %p65, %p66
      %s69 = sadd.s32 %s68, 1
      %p72 = scmp.eq.s32.totalorder %s13, 1
      %p73 = scmp.ne.s32.totalorder %s68, %s70
      %p74 = scmp.eq.s32.totalorder %s13, 0
      %p75 = por %p73, %p74
      %p76 = scmp.ne.s32.totalorder %s68, %s70
      %p77 = scmp.eq.s32.totalorder %s18, 1
      %p78 = por %p76, %p77
      %p79 = scmp.ne.s32.totalorder %s70, %s71
      %p80 = scmp.eq.s32.totalorder %s18, 0
      %p81 = por %p79, %p80
      %p82 = scmp.ne.s32.totalorder %s70, %s71
      %p83 = scmp.eq.s32.totalorder %s19, 1
      %p84 = por %p82, %p83
      %p86 = scmp.ne.s32.totalorder %s71, %s85
      %p87 = scmp.eq.s32.totalorder %s19, 0
      %p88 = por %p86, %p87
      %s90 = sadd.s32 %s89, 1
      %p93 = scmp.eq.s32.totalorder %s13, 1
      %p94 = scmp.ne.s32.totalorder %s89, %s91
      %p95 = scmp.eq.s32.totalorder %s13, 0
      %p96 = por %p94, %p95
      %p97 = scmp.ne.s32.totalorder %s89, %s91
      %p98 = scmp.eq.s32.totalorder %s18, 1
      %p99 = por %p97, %p98
      %p100 = scmp.ne.s32.totalorder %s91, %s92
      %p101 = scmp.eq.s32.totalorder %s18, 0
      %p102 = por %p100, %p101
      %p103 = scmp.ne.s32.totalorder %s91, %s92
      %p104 = scmp.eq.s32.totalorder %s19, 1
      %p105 = por %p103, %p104
      %p107 = scmp.ne.s32.totalorder %s92, %s106
      %p108 = scmp.eq.s32.totalorder %s19, 0
      %p109 = por %p107, %p108
      %p110 = scmp.le.s32.totalorder 1, %s13
      %p111 = scmp.lt.s32.totalorder %s13, 3
      %p112 = pnand %p110, %p111
      %p113 = pneg %p112
      // Predicated region
      $region9: #{tpu_custom_call.1} parent=5 // pred_check
        _
      $region10: #{tpu_custom_call.1} parent=5 // pred_check_branch
        %115 = sbr.rel (%p112) target = $region12
      $region11: #{tpu_custom_call.1} parent=5 // pred_region
        %s116 = ssub.s32 %s13, 1
        // Predicated region
        $region13: #{tpu_custom_call.1} parent=11 // pred_check
          %p117 = pneg %p60
        $region14: #{tpu_custom_call.1} parent=11 // pred_check_branch
          %119 = sbr.rel (%p117) target = $region16
        $region15: #{tpu_custom_call.1} parent=11 // pred_region
          _
        $region16: #{tpu_custom_call.1} parent=11 // pred_fallthru
          _
        // Predicated region
        $region17: #{tpu_custom_call.1} parent=11 // pred_check
          %p120 = pneg %p81
        $region18: #{tpu_custom_call.1} parent=11 // pred_check_branch
          %122 = sbr.rel (%p120) target = $region20
        $region19: #{tpu_custom_call.1} parent=11 // pred_region
          _
        $region20: #{tpu_custom_call.1} parent=11 // pred_fallthru
          _
      $region12: #{tpu_custom_call.1} parent=5 // pred_fallthru
        _
      %p123 = scmp.lt.s32.totalorder %s13, 2
      // Predicated region
      $region21: #{tpu_custom_call.1} parent=5 // pred_check
        %p124 = pneg %p123
      $region22: #{tpu_custom_call.1} parent=5 // pred_check_branch
        %126 = sbr.rel (%p124) target = $region24
      $region23: #{tpu_custom_call.1} parent=5 // pred_region
        // Predicated region
        $region25: #{tpu_custom_call.1} parent=23 // pred_check
          %p127 = pneg %p33
        $region26: #{tpu_custom_call.1} parent=23 // pred_check_branch
          %129 = sbr.rel (%p127) target = $region28
        $region27: #{tpu_custom_call.1} parent=23 // pred_region
          %s130 = sand.u32 %s23, 1
          %s131 = scalar_lea.sflag [#allocation3], %s130
          %s132 = sand.u32 %s23, 1
          %s133 = smul.addr %s132, 256
          %s134 = scalar_lea.vmem [#allocation2], %s133
          %s135 = smul.u32 32, %s13
          %s137 = ssub.s32 4096, 4096
          %138 = vsyncadd %s131, %s137
          %s139 = smul.addr %s135, 128
          %s140 = scalar_lea.hbm %s0, %s139
          %s141 = sshll.u32 %s134, 4
          %s142 = int_to_ptr.vmem [resolvable:$true] %s141
          %147 = dma.hbm_to_vmem [thread:$0]  %s140, 4096, %s142, %s131, 128, 128, 8
        $region28: #{tpu_custom_call.1} parent=23 // pred_fallthru
          _
      $region24: #{tpu_custom_call.1} parent=5 // pred_fallthru
        _
      %p148 = scmp.le.s32.totalorder 1, %s13
      %p149 = scmp.lt.s32.totalorder %s13, 3
      %p150 = pnand %p148, %p149
      %p151 = pneg %p150
      // Predicated region
      $region29: #{tpu_custom_call.1} parent=5 // pred_check
        _
      $region30: #{tpu_custom_call.1} parent=5 // pred_check_branch
        %153 = sbr.rel (%p150) target = $region32
      $region31: #{tpu_custom_call.1} parent=5 // pred_region
        %s154 = ssub.s32 %s13, 1
        %s155 = sand.u32 %s26, 1
        %s156 = scalar_lea.sflag [#allocation3], %s155
        %s157 = sand.u32 %s26, 1
        %s158 = smul.addr %s157, 256
        %s159 = scalar_lea.vmem [#allocation2], %s158
        // Predicated region
        $region33: #{tpu_custom_call.1} parent=31 // pred_check
          %p160 = pneg %p39
        $region34: #{tpu_custom_call.1} parent=31 // pred_check_branch
          %162 = sbr.rel (%p160) target = $region36
        $region35: #{tpu_custom_call.1} parent=31 // pred_region
          %163 = dma.done %s156, 4096
        $region36: #{tpu_custom_call.1} parent=31 // pred_fallthru
          _
        %s164 = sand.u32 %s26, 1
        %s165 = scalar_lea.sflag [#allocation3], %s164
        %s166 = sand.u32 %s26, 1
        %s167 = smul.addr %s166, 256
        %s168 = scalar_lea.vmem [#allocation2], %s167
        %p169 = pneg %p39
        %p170 = pneg %p36
        %p171 = pneg %p60
        %p172 = pneg %p57
        %p173 = pneg %p81
        %p174 = pneg %p78
        %p175 = pneg %p102
        %p176 = pneg %p99
        %s177 = smul.u32 32, %s18
        %p178 = scmp.eq.s32.totalorder %s18, 0
        // Predicated region
        $region37: #{tpu_custom_call.1} parent=31 // pred_check
          %p179 = pneg %p178
        $region38: #{tpu_custom_call.1} parent=31 // pred_check_branch
          %181 = sbr.rel (%p179) target = $region40
        $region39: #{tpu_custom_call.1} parent=31 // pred_region
          %182 = vst [vmem:[#allocation5] sm:$0x3] 0.0
        $region40: #{tpu_custom_call.1} parent=31 // pred_fallthru
          _
        %v183 = vld [vmem:[%s159] sm:$0xff]
        %v184 = vld [vmem:[%s159 + $0x8] sm:$0xff]
        %v185 = vld [vmem:[%s159 + $0x10] sm:$0xff]
        %v186 = vld [vmem:[%s159 + $0x18] sm:$0xff]
        %v187 = vld [vmem:[%s159 + $0x20] sm:$0xff]
        %v188 = vld [vmem:[%s159 + $0x28] sm:$0xff]
        %v189 = vld [vmem:[%s159 + $0x30] sm:$0xff]
        %v190 = vld [vmem:[%s159 + $0x38] sm:$0xff]
        %v191 = vld [vmem:[%s159 + $0x40] sm:$0xff]
        %v192 = vld [vmem:[%s159 + $0x48] sm:$0xff]
        %v193 = vld [vmem:[%s159 + $0x50] sm:$0xff]
        %v194 = vld [vmem:[%s159 + $0x58] sm:$0xff]
        %v195 = vld [vmem:[%s159 + $0x60] sm:$0xff]
        %v196 = vld [vmem:[%s159 + $0x68] sm:$0xff]
        %v197 = vld [vmem:[%s159 + $0x70] sm:$0xff]
        %v198 = vld [vmem:[%s159 + $0x78] sm:$0xff]
        %v199 = vld [vmem:[%s159 + $0x80] sm:$0xff]
        %v200 = vld [vmem:[%s159 + $0x88] sm:$0xff]
        %v201 = vld [vmem:[%s159 + $0x90] sm:$0xff]
        %v202 = vld [vmem:[%s159 + $0x98] sm:$0xff]
        %v203 = vld [vmem:[%s159 + $0xa0] sm:$0xff]
        %v204 = vld [vmem:[%s159 + $0xa8] sm:$0xff]
        %v205 = vld [vmem:[%s159 + $0xb0] sm:$0xff]
        %v206 = vld [vmem:[%s159 + $0xb8] sm:$0xff]
        %v207 = vld [vmem:[%s159 + $0xc0] sm:$0xff]
        %v208 = vld [vmem:[%s159 + $0xc8] sm:$0xff]
        %v209 = vld [vmem:[%s159 + $0xd0] sm:$0xff]
        %v210 = vld [vmem:[%s159 + $0xd8] sm:$0xff]
        %v211 = vld [vmem:[%s159 + $0xe0] sm:$0xff]
        %v212 = vld [vmem:[%s159 + $0xe8] sm:$0xff]
        %v213 = vld [vmem:[%s159 + $0xf0] sm:$0xff]
        %v214 = vld [vmem:[%s159 + $0xf8] sm:$0xff]
        %v215 = vadd.f32 %v183, %v184
        %v216 = vadd.f32 %v215, %v185
        %v217 = vadd.f32 %v216, %v186
        %v218 = vadd.f32 %v217, %v187
        %v219 = vadd.f32 %v218, %v188
        %v220 = vadd.f32 %v219, %v189
        %v221 = vadd.f32 %v220, %v190
        %v222 = vadd.f32 %v221, %v191
        %v223 = vadd.f32 %v222, %v192
        %v224 = vadd.f32 %v223, %v193
        %v225 = vadd.f32 %v224, %v194
        %v226 = vadd.f32 %v225, %v195
        %v227 = vadd.f32 %v226, %v196
        %v228 = vadd.f32 %v227, %v197
        %v229 = vadd.f32 %v228, %v198
        %v230 = vadd.f32 %v229, %v199
        %v231 = vadd.f32 %v230, %v200
        %v232 = vadd.f32 %v231, %v201
        %v233 = vadd.f32 %v232, %v202
        %v234 = vadd.f32 %v233, %v203
        %v235 = vadd.f32 %v234, %v204
        %v236 = vadd.f32 %v235, %v205
        %v237 = vadd.f32 %v236, %v206
        %v238 = vadd.f32 %v237, %v207
        %v239 = vadd.f32 %v238, %v208
        %v240 = vadd.f32 %v239, %v209
        %v241 = vadd.f32 %v240, %v210
        %v242 = vadd.f32 %v241, %v211
        %v243 = vadd.f32 %v242, %v212
        %v244 = vadd.f32 %v243, %v213
        %v245 = vadd.f32 %v244, %v214
        %v246 = vrot.slane %v245, 4
        %v247 = vadd.f32 %v245, %v246
        %v248 = vrot.slane %v247, 2
        %v249 = vadd.f32 %v247, %v248
        %v250 = vrot.slane %v249, 1
        %v251 = vadd.f32 %v249, %v250
        %v252 = vmul.f32 %v183, %v183
        %v253 = vmul.f32 %v184, %v184
        %v254 = vmul.f32 %v185, %v185
        %v255 = vmul.f32 %v186, %v186
        %v256 = vmul.f32 %v187, %v187
        %v257 = vmul.f32 %v188, %v188
        %v258 = vmul.f32 %v189, %v189
        %v259 = vmul.f32 %v190, %v190
        %v260 = vmul.f32 %v191, %v191
        %v261 = vmul.f32 %v192, %v192
        %v262 = vmul.f32 %v193, %v193
        %v263 = vmul.f32 %v194, %v194
        %v264 = vmul.f32 %v195, %v195
        %v265 = vmul.f32 %v196, %v196
        %v266 = vmul.f32 %v197, %v197
        %v267 = vmul.f32 %v198, %v198
        %v268 = vmul.f32 %v199, %v199
        %v269 = vmul.f32 %v200, %v200
        %v270 = vmul.f32 %v201, %v201
        %v271 = vmul.f32 %v202, %v202
        %v272 = vmul.f32 %v203, %v203
        %v273 = vmul.f32 %v204, %v204
        %v274 = vmul.f32 %v205, %v205
        %v275 = vmul.f32 %v206, %v206
        %v276 = vmul.f32 %v207, %v207
        %v277 = vmul.f32 %v208, %v208
        %v278 = vmul.f32 %v209, %v209
        %v279 = vmul.f32 %v210, %v210
        %v280 = vmul.f32 %v211, %v211
        %v281 = vmul.f32 %v212, %v212
        %v282 = vmul.f32 %v213, %v213
        %v283 = vmul.f32 %v214, %v214
        %v284 = vadd.f32 %v252, %v253
        %v285 = vadd.f32 %v284, %v254
        %v286 = vadd.f32 %v285, %v255
        %v287 = vadd.f32 %v286, %v256
        %v288 = vadd.f32 %v287, %v257
        %v289 = vadd.f32 %v288, %v258
        %v290 = vadd.f32 %v289, %v259
        %v291 = vadd.f32 %v290, %v260
        %v292 = vadd.f32 %v291, %v261
        %v293 = vadd.f32 %v292, %v262
        %v294 = vadd.f32 %v293, %v263
        %v295 = vadd.f32 %v294, %v264
        %v296 = vadd.f32 %v295, %v265
        %v297 = vadd.f32 %v296, %v266
        %v298 = vadd.f32 %v297, %v267
        %v299 = vadd.f32 %v298, %v268
        %v300 = vadd.f32 %v299, %v269
        %v301 = vadd.f32 %v300, %v270
        %v302 = vadd.f32 %v301, %v271
        %v303 = vadd.f32 %v302, %v272
        %v304 = vadd.f32 %v303, %v273
        %v305 = vadd.f32 %v304, %v274
        %v306 = vadd.f32 %v305, %v275
        %v307 = vadd.f32 %v306, %v276
        %v308 = vadd.f32 %v307, %v277
        %v309 = vadd.f32 %v308, %v278
        %v310 = vadd.f32 %v309, %v279
        %v311 = vadd.f32 %v310, %v280
        %v312 = vadd.f32 %v311, %v281
        %v313 = vadd.f32 %v312, %v282
        %v314 = vadd.f32 %v313, %v283
        %v315 = vrot.slane %v314, 4
        %v316 = vadd.f32 %v314, %v315
        %v317 = vrot.slane %v316, 2
        %v318 = vadd.f32 %v316, %v317
        %v319 = vrot.slane %v318, 1
        %v320 = vadd.f32 %v318, %v319
        %vm321 = vcmask 1040384
        %v322 = vsel %vm321, %v251, %v320
        %v323 = vld [vmem:[#allocation5] sm:$0x3]
        %v324 = vadd.f32 %v323, %v322
        %325 = vst [vmem:[#allocation5] sm:$0x3] %v324
        %p326 = scmp.eq.s32.totalorder %s18, 1
        // Predicated region
        $region41: #{tpu_custom_call.1} parent=31 // pred_check
          %p327 = pneg %p326
        $region42: #{tpu_custom_call.1} parent=31 // pred_check_branch
          %329 = sbr.rel (%p327) target = $region44
        $region43: #{tpu_custom_call.1} parent=31 // pred_region
          %v330 = vld [vmem:[#allocation5] sm:$0x3]
          %v331 = vmul.f32 %v330, 0.001953125
          %v332 = vmul.f32 %v331, %v331
          %v334 = vrot.slane %v332, 7
          %v336 = vsub.f32 %v331, %v334
          %v337 = vadd.f32 %v336, 1e-05
          %v338 = vrsqrt.pop %v337
          %v339 = vld [vmem:[%s1] sm:$0x1]
          %v342 = vunpack.c.l.s4 1966171168
          %v343 = vunpack.c.0.s8 %v342
          %v344 = vlaneseq
          %v345 = vshrl.u32 %v344, 7
          %v346 = vsub.s32 %v343, %v345
          %v347 = vrot.slane %v338, %v346
          %v348 = vcombine.high %v347, %v347
          %v350 = vunpack.c.l.s4 1966171168
          %v351 = vunpack.c.0.s8 %v350
          %v352 = vlaneseq
          %v353 = vshrl.u32 %v352, 7
          %v354 = vsub.s32 %v351, %v353
          %v355 = vrot.slane %v348, %v354
          %v357 = vmul.f32 %v339, %v355
          %v358 = vld [vmem:[%s2] sm:$0x1]
          %v359 = vmul.f32 %v331, %v357
          %v360 = vsub.f32 %v358, %v359
          %v362 = vlaneseq
          %v363 = vshrl.u32 %v362, 7
          %v364 = vsub.s32 0, %v363
          %v365 = vrot.slane %v360, %v364
          %v367 = vsel %vm321, %v357, %v365
          %368 = vst [vmem:[#allocation5] sm:$0x3] %v367
        $region44: #{tpu_custom_call.1} parent=31 // pred_fallthru
          _
        // Predicated region
        $region45: #{tpu_custom_call.1} parent=31 // pred_check
          %p369 = pneg %p99
        $region46: #{tpu_custom_call.1} parent=31 // pred_check_branch
          %371 = sbr.rel (%p369) target = $region48
        $region47: #{tpu_custom_call.1} parent=31 // pred_region
          %s373 = ssub.s32 32, 32
          %374 = vsyncadd [#allocation4], %s373
          %s376 = sshll.u32 [#allocation5], 4
          %s377 = int_to_ptr.vmem [resolvable:$true] %s376
          %379 = dma.vmem_to_hbm [thread:$0]  %s377, 32, %s3, [#allocation4]
        $region48: #{tpu_custom_call.1} parent=31 // pred_fallthru
          _
        // Predicated region
        $region49: #{tpu_custom_call.1} parent=31 // pred_check
          %p380 = pneg %p99
        $region50: #{tpu_custom_call.1} parent=31 // pred_check_branch
          %382 = sbr.rel (%p380) target = $region52
        $region51: #{tpu_custom_call.1} parent=31 // pred_region
          %383 = dma.done [#allocation4], 32
        $region52: #{tpu_custom_call.1} parent=31 // pred_fallthru
          _
      $region32: #{tpu_custom_call.1} parent=5 // pred_fallthru
        _
      %p384 = scmp.le.s32.totalorder 2, %s13
      // Predicated region
      $region53: #{tpu_custom_call.1} parent=5 // pred_check
        %p385 = pneg %p384
      $region54: #{tpu_custom_call.1} parent=5 // pred_check_branch
        %387 = sbr.rel (%p385) target = $region56
      $region55: #{tpu_custom_call.1} parent=5 // pred_region
        %s388 = ssub.s32 %s13, 2
      $region56: #{tpu_custom_call.1} parent=5 // pred_fallthru
        _
    $region6: #{tpu_custom_call.1} parent=1 // loop_footer
      %s17 = sadd.s32 1, %s13
    $region7: #{tpu_custom_call.1} parent=1 // loop_footer_branch
      %12 = sbr.rel target = $region3
    $region8: #{tpu_custom_call.1} parent=1 // loop_exit
      _
    %389 = vsyncpa [#allocation3], 1
    %s390 = scalar_lea.sflag [#allocation3], 1
    %391 = vsyncpa %s390, 1
    %392 = vsyncpa [#allocation4], 1
    %s393 = scalar_lea.sflag [#allocation4], 1
    %394 = vsyncpa %s393, 1

</llo_original>
